<compile_context>
chip_gen: v6e
topology: v6e:2x2x1
jax: 0.10.0
libtpu: 0.0.40
codegen_flags: <defaults>
</compile_context>

<pallas_src>
import functools

import jax
import jax.numpy as jnp
from jax.experimental import pallas as pl
from jax.experimental.pallas import tpu as pltpu


def valuenet_kernel(x_ref, w1_ref, b1_ref, w2_ref, b2_ref, o_ref):
    # x_ref:  (TILE_B, F)  batch on sublanes, features on lanes (edge blocks OK)
    # w1_ref: (H, F)       fc1.weight in native PyTorch layout (resident)
    # b1_ref: (H, 1)       fc1.bias as a column (broadcasts over batch lanes)
    # w2_ref: (H, 1)       fc2.weight as a column (VPU matvec weight)
    # b2_ref: (1, 1) SMEM  fc2.bias scalar
    # o_ref:  (1, TILE_B)  lane-dense output: batch on lanes

    # fc1: contract w1 dim-1 with x dim-1 ("NT" matmul, MXU-native) so the batch
    # dimension lands on lanes and stays there; accumulate in f32.
    h = jax.lax.dot_general(
        w1_ref[...], x_ref[...],
        dimension_numbers=(((1,), (1,)), ((), ())),
        preferred_element_type=jnp.float32,
    )                                                  # (H, TILE_B) f32
    h = jnp.maximum(h + b1_ref[...], 0.0)              # bias + ReLU on the VPU

    # fc2 as a matvec: multiply on the VPU, sublane-reduce on the XLU.  Keeps an
    # N=1 matmul (1/128th of an MXU output tile) off the MXU entirely.
    out = jnp.sum(h * w2_ref[...], axis=0, keepdims=True) + b2_ref[0, 0]
    o_ref[...] = out.astype(o_ref.dtype)               # (1, TILE_B), full-lane store


def _round_up(n, m):
    return ((n + m - 1) // m) * m


def _cdiv(a, b):
    return (a + b - 1) // b


def prepare_params(w1, b1, w2, b2, compute_dtype=jnp.float32):
    """One-time layout prep (hoisted out of the per-step path).

    In : PyTorch Linear layouts  w1 (H, F), b1 (H,), w2 (1, H), b2 (1,).
    Out: kernel layouts          w1 (H, F) in compute_dtype, b1 (H, 1) f32,
                                 w2 (H, 1) f32, b2 (1, 1) f32 (SMEM scalar).

    Pass compute_dtype=jnp.bfloat16 (and feed bf16 activations) to halve x/w1
    HBM traffic on v6e/v7x; accumulation stays f32 inside the kernel.
    """
    return (
        jnp.asarray(w1, compute_dtype),                 # (H, F) — used as-is
        jnp.asarray(b1, jnp.float32).reshape(-1, 1),    # (H, 1)
        jnp.asarray(w2, jnp.float32).reshape(-1, 1),    # (H, 1)
        jnp.asarray(b2, jnp.float32).reshape(1, 1),     # (1, 1) scalar -> SMEM
    )


@functools.partial(jax.jit, static_argnames=("tile_b",))
def value_net_forward(x, params, *, tile_b=8192):
    """ValueNet forward: fc2(relu(fc1(x))).  x: (B, F) float -> (B, 1) float32."""
    w1, b1_col, w2_col, b2_s = params
    B, F = x.shape
    H = w1.shape[0]

    # No wrapper cast for matching dtypes; if the caller mixes dtypes we align x
    # to the weight dtype (no-op on the intended f32/f32 and bf16/bf16 paths).
    if x.dtype != w1.dtype:
        x = x.astype(w1.dtype)

    # ---- Tile selection (all static Python math) ---------------------------
    # Lane-dense batch tile: multiple of 128 lanes.  VMEM footprint per step is
    # ~2*tile_b*F*itemsize (double-buffered x) + tile_b*H*4 (f32 h) + small out:
    # ~3 MiB at the default tile_b=8192, far under the 32 MiB scoped limit on
    # every generation (v5e default scoped is 16 MiB -> raised explicitly below).
    assert tile_b >= 1
    cap = _round_up(tile_b, 128)
    b128 = _round_up(B, 128)
    n_tiles = _cdiv(b128, cap)
    # v7x has 2 TensorCores; give the "parallel" grid axis >= 2 steps for large
    # batches so both cores engage.  Small B stays a single step.
    if b128 >= 2048 and n_tiles < 2:
        n_tiles = 2
    tile_b = _round_up(_cdiv(b128, n_tiles), 128)
    n_tiles = _cdiv(b128, tile_b)
    assert tile_b % 128 == 0 and tile_b >= 128
    b_out = n_tiles * tile_b          # only the (tiny) output is padded; x is not
    grid = (n_tiles,)

    itemsize = jnp.dtype(x.dtype).itemsize
    flops = 2 * B * H * (F + 1)
    bytes_accessed = (B * F * itemsize + H * F * jnp.dtype(w1.dtype).itemsize
                      + 4 * (2 * H + 1) + 4 * b_out)

    out = pl.pallas_call(
        valuenet_kernel,
        out_shape=jax.ShapeDtypeStruct((1, b_out), jnp.float32),
        grid_spec=pltpu.PrefetchScalarGridSpec(
            num_scalar_prefetch=0,
            grid=grid,
            in_specs=[
                # x: last grid step may be a ragged edge block (only valid rows
                # are DMA'd; the rest of the buffer is never mixed into valid
                # outputs since the math is purely row-wise).
                pl.BlockSpec((tile_b, F), lambda i: (i, 0)),          # x tile
                pl.BlockSpec((H, F), lambda i: (0, 0)),               # w1 (resident)
                pl.BlockSpec((H, 1), lambda i: (0, 0)),               # b1 column
                pl.BlockSpec((H, 1), lambda i: (0, 0)),               # w2 column
                pl.BlockSpec(memory_space=pltpu.MemorySpace.SMEM),    # b2 scalar
            ],
            out_specs=pl.BlockSpec((1, tile_b), lambda i: (0, i)),    # lane-dense
        ),
        compiler_params=pltpu.CompilerParams(
            dimension_semantics=("parallel",),
            vmem_limit_bytes=64 * 1024 * 1024,
        ),
        cost_estimate=pl.CostEstimate(
            flops=flops, transcendentals=0, bytes_accessed=int(bytes_accessed)),
    )(x, w1, b1_col, w2_col, b2_s)

    # (1, b_out) lane-dense kernel output -> (B, 1) to match the PyTorch module.
    # TODO(synk): callers that can consume (B,) / (1, B) should skip this relayout.
    return out.reshape(b_out, 1)[:B]


def init_params(key, input_size, hidden_layer_size):
    """Deterministic init mimicking torch.nn.Linear: U(-1/sqrt(fan_in), 1/sqrt(fan_in))."""
    k1, k2, k3, k4 = jax.random.split(key, 4)
    bound1 = 1.0 / jnp.sqrt(jnp.float32(input_size))
    bound2 = 1.0 / jnp.sqrt(jnp.float32(hidden_layer_size))
    w1 = jax.random.uniform(k1, (hidden_layer_size, input_size), jnp.float32, -bound1, bound1)
    b1 = jax.random.uniform(k2, (hidden_layer_size,), jnp.float32, -bound1, bound1)
    w2 = jax.random.uniform(k3, (1, hidden_layer_size), jnp.float32, -bound2, bound2)
    b2 = jax.random.uniform(k4, (1,), jnp.float32, -bound2, bound2)
    return w1, b1, w2, b2


if __name__ == "__main__":
    key = jax.random.PRNGKey(0)
    k_x, k_p, k_x2 = jax.random.split(key, 3)

    batch, input_size, hidden = 8, 16, 64   # module default hidden_layer_size

    w1, b1, w2, b2 = init_params(k_p, input_size, hidden)
    params = prepare_params(w1, b1, w2, b2)          # one-time layout prep (f32)

    def reference(xx):  # pure-JAX reference of the PyTorch forward
        return jnp.maximum(xx @ w1.T + b1, 0.0) @ w2.T + b2

    # Small demo batch (single grid step, ragged edge block: 8 valid of 128 rows).
    x = jax.random.normal(k_x, (batch, input_size), jnp.float32)
    out = jax.block_until_ready(value_net_forward(x, params))
    assert out.shape == (batch, 1)
    assert jnp.allclose(out, reference(x), atol=1e-5, rtol=1e-5)

    # Non-multiple batch with default tiling: still one tile, no x padding pass.
    x_big = jax.random.normal(k_x2, (600, input_size), jnp.float32)
    out_big = jax.block_until_ready(value_net_forward(x_big, params))
    assert out_big.shape == (600, 1)
    assert jnp.allclose(out_big, reference(x_big), atol=1e-5, rtol=1e-5)

    # Force a multi-step grid (3 steps, ragged last tile) to exercise edge-block
    # reads of un-padded x and resident weights across grid steps.
    out_grid = jax.block_until_ready(value_net_forward(x_big, params, tile_b=256))
    assert out_grid.shape == (600, 1)
    assert jnp.allclose(out_grid, reference(x_big), atol=1e-5, rtol=1e-5)

    # Optional bf16 activation path (halves x/w1 HBM traffic on v6e/v7x,
    # f32 accumulation inside the kernel). Looser tolerance vs. f32 reference.
    params_bf16 = prepare_params(w1, b1, w2, b2, compute_dtype=jnp.bfloat16)
    out_bf16 = jax.block_until_ready(
        value_net_forward(x_big.astype(jnp.bfloat16), params_bf16))
    assert out_bf16.shape == (600, 1)
    assert jnp.allclose(out_bf16, reference(x_big), atol=5e-2, rtol=5e-2)

    print("KERNEL_OK")
</pallas_src>

<mosaic_0001>
module attributes {stable_mosaic.version = 11 : i64} {
  func.func @valuenet_kernel(%arg0: i32, %arg1: memref<128x16xf32, #tpu.memory_space<vmem>>, %arg2: memref<64x16xf32, #tpu.memory_space<vmem>>, %arg3: memref<64x1xf32, #tpu.memory_space<vmem>>, %arg4: memref<64x1xf32, #tpu.memory_space<vmem>>, %arg5: memref<1x1xf32, #tpu.memory_space<smem>>, %arg6: memref<1x128xf32, #tpu.memory_space<vmem>>) attributes {dimension_semantics = [#tpu.dimension_semantics<parallel>], iteration_bounds = array<i64: 1>, scalar_prefetch = 0 : i64, scratch_operands = 0 : i64, tpu.core_type = #tpu.core_type<tc>, window_params = [{transform_indices = @transform_0, window_bounds = array<i64: 128, 16>}, {pipeline_mode = #tpu.pipeline_mode<synchronous>, transform_indices = @transform_1, window_bounds = array<i64: 64, 16>}, {pipeline_mode = #tpu.pipeline_mode<synchronous>, transform_indices = @transform_2, window_bounds = array<i64: 64, 1>}, {pipeline_mode = #tpu.pipeline_mode<synchronous>, transform_indices = @transform_3, window_bounds = array<i64: 64, 1>}, {transform_indices = @transform_4, window_bounds = array<i64: 1, 1>}, {transform_indices = @transform_5, window_bounds = array<i64: 1, 128>}]} {
    %c0 = arith.constant 0 : index
    %c0_0 = arith.constant 0 : index
    %0 = vector.load %arg2[%c0, %c0_0] : memref<64x16xf32, #tpu.memory_space<vmem>>, vector<64x16xf32>
    %c0_1 = arith.constant 0 : index
    %c0_2 = arith.constant 0 : index
    %1 = vector.load %arg1[%c0_1, %c0_2] : memref<128x16xf32, #tpu.memory_space<vmem>>, vector<128x16xf32>
    %cst = arith.constant dense<0.000000e+00> : vector<64x128xf32>
    %2 = tpu.matmul %0, %1, %cst {dimension_numbers = #tpu.dot_dimension_numbers<[1], [1], [0], [0], [0, 0, 1, 0], [], []>} : vector<64x16xf32>, vector<128x16xf32>, vector<64x128xf32> -> vector<64x128xf32>
    %c0_3 = arith.constant 0 : index
    %c0_4 = arith.constant 0 : index
    %3 = vector.load %arg3[%c0_3, %c0_4] : memref<64x1xf32, #tpu.memory_space<vmem>>, vector<64x1xf32>
    %4 = vector.broadcast %3 : vector<64x1xf32> to vector<64x128xf32>
    %5 = arith.addf %2, %4 : vector<64x128xf32>
    %cst_5 = arith.constant 0.000000e+00 : f32
    %6 = vector.broadcast %cst_5 : f32 to vector<64x128xf32>
    %7 = arith.maximumf %5, %6 : vector<64x128xf32>
    %c0_6 = arith.constant 0 : index
    %c0_7 = arith.constant 0 : index
    %8 = vector.load %arg4[%c0_6, %c0_7] : memref<64x1xf32, #tpu.memory_space<vmem>>, vector<64x1xf32>
    %9 = vector.broadcast %8 : vector<64x1xf32> to vector<64x128xf32>
    %10 = arith.mulf %7, %9 : vector<64x128xf32>
    %cst_8 = arith.constant dense<0.000000e+00> : vector<128xf32>
    %11 = vector.multi_reduction <add>, %10, %cst_8 [0] : vector<64x128xf32> to vector<128xf32>
    %12 = vector.shape_cast %11 : vector<128xf32> to vector<1x128xf32>
    %c0_9 = arith.constant 0 : index
    %c0_10 = arith.constant 0 : index
    %13 = memref.load %arg5[%c0_9, %c0_10] : memref<1x1xf32, #tpu.memory_space<smem>>
    %14 = vector.broadcast %13 : f32 to vector<1x128xf32>
    %15 = arith.addf %12, %14 : vector<1x128xf32>
    %c0_11 = arith.constant 0 : index
    %c0_12 = arith.constant 0 : index
    %16 = vector.load %arg6[%c0_11, %c0_12] : memref<1x128xf32, #tpu.memory_space<vmem>>, vector<1x128xf32>
    tpu.vector_store %arg6[%c0_11, %c0_12], %15 {strides = array<i32>} : memref<1x128xf32, #tpu.memory_space<vmem>>, vector<1x128xf32>,
    return
  }
  func.func @transform_0(%arg0: i32) -> (i32, i32) {
    %c0_i32 = arith.constant 0 : i32
    %c0_i32_0 = arith.constant 0 : i32
    return %arg0, %c0_i32 : i32, i32
  }
  func.func @transform_1(%arg0: i32) -> (i32, i32) {
    %c0_i32 = arith.constant 0 : i32
    %c0_i32_0 = arith.constant 0 : i32
    %c0_i32_1 = arith.constant 0 : i32
    return %c0_i32, %c0_i32_0 : i32, i32
  }
  func.func @transform_2(%arg0: i32) -> (i32, i32) {
    %c0_i32 = arith.constant 0 : i32
    %c0_i32_0 = arith.constant 0 : i32
    %c0_i32_1 = arith.constant 0 : i32
    return %c0_i32, %c0_i32_0 : i32, i32
  }
  func.func @transform_3(%arg0: i32) -> (i32, i32) {
    %c0_i32 = arith.constant 0 : i32
    %c0_i32_0 = arith.constant 0 : i32
    %c0_i32_1 = arith.constant 0 : i32
    return %c0_i32, %c0_i32_0 : i32, i32
  }
  func.func @transform_4(%arg0: i32) -> (i32, i32) {
    %c0_i32 = arith.constant 0 : i32
    %c0_i32_0 = arith.constant 0 : i32
    %c0_i32_1 = arith.constant 0 : i32
    return %c0_i32, %c0_i32_0 : i32, i32
  }
  func.func @transform_5(%arg0: i32) -> (i32, i32) {
    %c0_i32 = arith.constant 0 : i32
    %c0_i32_0 = arith.constant 0 : i32
    return %c0_i32, %arg0 : i32, i32
  }
}

</mosaic_0001>

<llo_original>
// kernel: value_net_forward.1
$region0: #{value_net_forward.1}
  #allocation0 [shape = 'u32[]', space=smem, size = 0x4, offset = 0x4, fixed_abs, tag = 'smem constant byte address 0x4 - core index']
  #allocation1 [shape = 'u32[144,128]{1,0:T(1,128)}', space=vmem, size = 0x12000, scoped, tag = 'internal scratch']
  #allocation2 [shape = 'f32[1,1]{1,0:T(1,128)S(6)}', space=smem, size = 0x200, scoped, tag = 'scoped memory for value_net_forward.1']
  %s0 = inlined_call_operand.vmem [shape: f32[8,16], index: 0, kind: input, shape index: {}]
  %s1 = inlined_call_operand.vmem [shape: f32[64,16], index: 1, kind: input, shape index: {}]
  %s2 = inlined_call_operand.vmem [shape: f32[64,1], index: 2, kind: input, shape index: {}]
  %s3 = inlined_call_operand.vmem [shape: f32[64,1], index: 3, kind: input, shape index: {}]
  %s4 = inlined_call_operand.<no memory space> [shape: f32[1,1], index: 4, kind: input, shape index: {}]
  %s5 = inlined_call_operand.vmem [shape: f32[1,128], index: 5, kind: output, shape index: {}]
  %s6 = sld [smem:[#allocation0]]
  $region30: #{value_net_forward.1} parent=0
    _
  %s8 = ssub.s32 1, %s6
  %s9 = scalar_select 0, %s8, %s6
  %10 = sst [smem:[#allocation2]] %s4
  // Predicated region
  $region2: #{value_net_forward.1} parent=0 // pred_check
    _
  $region3: #{value_net_forward.1} parent=0 // pred_check_branch
    %12 = sbr.rel (0) target = $region5
  $region4: #{value_net_forward.1} parent=0 // pred_region
    _
  $region5: #{value_net_forward.1} parent=0 // pred_fallthru
    _
  // Predicated region
  $region6: #{value_net_forward.1} parent=0 // pred_check
    _
  $region7: #{value_net_forward.1} parent=0 // pred_check_branch
    %14 = sbr.rel (0) target = $region9
  $region8: #{value_net_forward.1} parent=0 // pred_region
    _
  $region9: #{value_net_forward.1} parent=0 // pred_fallthru
    _
  // Predicated region
  $region10: #{value_net_forward.1} parent=0 // pred_check
    _
  $region11: #{value_net_forward.1} parent=0 // pred_check_branch
    %16 = sbr.rel (0) target = $region13
  $region12: #{value_net_forward.1} parent=0 // pred_region
    _
  $region13: #{value_net_forward.1} parent=0 // pred_fallthru
    _
  // Predicated region
  $region14: #{value_net_forward.1} parent=0 // pred_check
    _
  $region15: #{value_net_forward.1} parent=0 // pred_check_branch
    %18 = sbr.rel (0) target = $region17
  $region16: #{value_net_forward.1} parent=0 // pred_region
    _
  $region17: #{value_net_forward.1} parent=0 // pred_fallthru
    _
  // Predicated region
  $region18: #{value_net_forward.1} parent=0 // pred_check
    _
  $region19: #{value_net_forward.1} parent=0 // pred_check_branch
    %20 = sbr.rel (0) target = $region21
  $region20: #{value_net_forward.1} parent=0 // pred_region
    _
  $region21: #{value_net_forward.1} parent=0 // pred_fallthru
    _
  %v21 = vld [vmem:[%s1] sm:$0xff]
  %v22 = vld [vmem:[%s1 + $0x8] sm:$0xff]
  %v23 = vld [vmem:[%s1 + $0x10] sm:$0xff]
  %v24 = vld [vmem:[%s1 + $0x18] sm:$0xff]
  %v25 = vld [vmem:[%s1 + $0x20] sm:$0xff]
  %v26 = vld [vmem:[%s1 + $0x28] sm:$0xff]
  %v27 = vld [vmem:[%s1 + $0x30] sm:$0xff]
  %v28 = vld [vmem:[%s1 + $0x38] sm:$0xff]
  %v29 = vld [vmem:[%s0] sm:$0xff]
  %v30 = vld [vmem:[%s0 + $0x8] sm:$0xff]
  %v31 = vld [vmem:[%s0 + $0x10] sm:$0xff]
  %v32 = vld [vmem:[%s0 + $0x18] sm:$0xff]
  %v33 = vld [vmem:[%s0 + $0x20] sm:$0xff]
  %v34 = vld [vmem:[%s0 + $0x28] sm:$0xff]
  %v35 = vld [vmem:[%s0 + $0x30] sm:$0xff]
  %v36 = vld [vmem:[%s0 + $0x38] sm:$0xff]
  %v37 = vld [vmem:[%s0 + $0x40] sm:$0xff]
  %v38 = vld [vmem:[%s0 + $0x48] sm:$0xff]
  %v39 = vld [vmem:[%s0 + $0x50] sm:$0xff]
  %v40 = vld [vmem:[%s0 + $0x58] sm:$0xff]
  %v41 = vld [vmem:[%s0 + $0x60] sm:$0xff]
  %v42 = vld [vmem:[%s0 + $0x68] sm:$0xff]
  %v43 = vld [vmem:[%s0 + $0x70] sm:$0xff]
  %v44 = vld [vmem:[%s0 + $0x78] sm:$0xff]
  %v45 = vld [vmem:[%s2] sm:$0xff]
  %v46 = vld [vmem:[%s2 + $0x8] sm:$0xff]
  %v47 = vld [vmem:[%s2 + $0x10] sm:$0xff]
  %v48 = vld [vmem:[%s2 + $0x18] sm:$0xff]
  %v49 = vld [vmem:[%s2 + $0x20] sm:$0xff]
  %v50 = vld [vmem:[%s2 + $0x28] sm:$0xff]
  %v51 = vld [vmem:[%s2 + $0x30] sm:$0xff]
  %v52 = vld [vmem:[%s2 + $0x38] sm:$0xff]
  %54 = vset.pattern.permute.xlu0 0
  %55 = vperm.xlu0 %54, %v45
  %v56 = vpop.permute.xlu0 %55
  %59 = vset.pattern.permute.xlu0 0
  %60 = vperm.xlu0 %59, %v46
  %v61 = vpop.permute.xlu0 %60
  %64 = vset.pattern.permute.xlu0 0
  %65 = vperm.xlu0 %64, %v47
  %v66 = vpop.permute.xlu0 %65
  %69 = vset.pattern.permute.xlu0 0
  %70 = vperm.xlu0 %69, %v48
  %v71 = vpop.permute.xlu0 %70
  %74 = vset.pattern.permute.xlu0 0
  %75 = vperm.xlu0 %74, %v49
  %v76 = vpop.permute.xlu0 %75
  %79 = vset.pattern.permute.xlu0 0
  %80 = vperm.xlu0 %79, %v50
  %v81 = vpop.permute.xlu0 %80
  %84 = vset.pattern.permute.xlu0 0
  %85 = vperm.xlu0 %84, %v51
  %v86 = vpop.permute.xlu0 %85
  %89 = vset.pattern.permute.xlu0 0
  %90 = vperm.xlu0 %89, %v52
  %v91 = vpop.permute.xlu0 %90
  %vm93 = vcmask 130048
  %v95 = vsel %vm93, %v21, 0
  %v98 = vsel %vm93, %v22, 0
  %v101 = vsel %vm93, %v23, 0
  %v104 = vsel %vm93, %v24, 0
  %v107 = vsel %vm93, %v25, 0
  %v110 = vsel %vm93, %v26, 0
  %v113 = vsel %vm93, %v27, 0
  %v116 = vsel %vm93, %v28, 0
  %v119 = vsel %vm93, %v29, 0
  %v122 = vsel %vm93, %v30, 0
  %v125 = vsel %vm93, %v31, 0
  %v128 = vsel %vm93, %v32, 0
  %v131 = vsel %vm93, %v33, 0
  %v134 = vsel %vm93, %v34, 0
  %v137 = vsel %vm93, %v35, 0
  %v140 = vsel %vm93, %v36, 0
  %v143 = vsel %vm93, %v37, 0
  %v146 = vsel %vm93, %v38, 0
  %v149 = vsel %vm93, %v39, 0
  %v152 = vsel %vm93, %v40, 0
  %v155 = vsel %vm93, %v41, 0
  %v158 = vsel %vm93, %v42, 0
  %v161 = vsel %vm93, %v43, 0
  %v164 = vsel %vm93, %v44, 0
  %166 = vmatprep.subr.mxu0 0.0
  %167 = vmatpush1.xpose.msra.mxu0 %v164
  %168 = vmatprep.subr.mxu0 0.0
  %169 = vmatpush1.xpose.msra.mxu0 %v161
  %170 = vmatprep.subr.mxu0 0.0
  %171 = vmatpush1.xpose.msra.mxu0 %v158
  %172 = vmatprep.subr.mxu0 0.0
  %173 = vmatpush1.xpose.msra.mxu0 %v155
  %174 = vmatprep.subr.mxu0 0.0
  %175 = vmatpush1.xpose.msra.mxu0 %v152
  %176 = vmatprep.subr.mxu0 0.0
  %177 = vmatpush1.xpose.msra.mxu0 %v149
  %178 = vmatprep.subr.mxu0 0.0
  %179 = vmatpush1.xpose.msra.mxu0 %v146
  %180 = vmatprep.subr.mxu0 0.0
  %181 = vmatpush1.xpose.msra.mxu0 %v143
  %182 = vmatprep.subr.mxu0 0.0
  %183 = vmatpush1.xpose.msra.mxu0 %v140
  %184 = vmatprep.subr.mxu0 0.0
  %185 = vmatpush1.xpose.msra.mxu0 %v137
  %186 = vmatprep.subr.mxu0 0.0
  %187 = vmatpush1.xpose.msra.mxu0 %v134
  %188 = vmatprep.subr.mxu0 0.0
  %189 = vmatpush1.xpose.msra.mxu0 %v131
  %190 = vmatprep.subr.mxu0 0.0
  %191 = vmatpush1.xpose.msra.mxu0 %v128
  %192 = vmatprep.subr.mxu0 0.0
  %193 = vmatpush1.xpose.msra.mxu0 %v125
  %194 = vmatprep.subr.mxu0 0.0
  %195 = vmatpush1.xpose.msra.mxu0 %v122
  %196 = vmatprep.subr.mxu0 0.0
  %197 = vmatpush1.xpose.msra.mxu0 %v119
  %198 = vmatprep.subr.mxu0 0.0
  %199 = vmatpush2.xpose.msra.mxu0 0.0
  %200 = vmatprep.subr.mxu0 0.0
  %201 = vmatpush2.xpose.msra.mxu0 0.0
  %202 = vmatprep.subr.mxu0 0.0
  %203 = vmatpush2.xpose.msra.mxu0 0.0
  %204 = vmatprep.subr.mxu0 0.0
  %205 = vmatpush2.xpose.msra.mxu0 0.0
  %206 = vmatprep.subr.mxu0 0.0
  %207 = vmatpush2.xpose.msra.mxu0 0.0
  %208 = vmatprep.subr.mxu0 0.0
  %209 = vmatpush2.xpose.msra.mxu0 0.0
  %210 = vmatprep.subr.mxu0 0.0
  %211 = vmatpush2.xpose.msra.mxu0 0.0
  %212 = vmatprep.subr.mxu0 0.0
  %213 = vmatpush2.xpose.msra.mxu0 0.0
  %214 = vmatprep.subr.mxu0 0.0
  %215 = vmatpush2.xpose.msra.mxu0 0.0
  %216 = vmatprep.subr.mxu0 0.0
  %217 = vmatpush2.xpose.msra.mxu0 0.0
  %218 = vmatprep.subr.mxu0 0.0
  %219 = vmatpush2.xpose.msra.mxu0 0.0
  %220 = vmatprep.subr.mxu0 0.0
  %221 = vmatpush2.xpose.msra.mxu0 0.0
  %222 = vmatprep.subr.mxu0 0.0
  %223 = vmatpush2.xpose.msra.mxu0 0.0
  %224 = vmatprep.subr.mxu0 0.0
  %225 = vmatpush2.xpose.msra.mxu0 0.0
  %226 = vmatprep.subr.mxu0 0.0
  %227 = vmatpush2.xpose.msra.mxu0 0.0
  %228 = vmatprep.subr.mxu0 0.0
  %229 = vmatpush2.xpose.msra.mxu0 0.0
  %230 = vmatprep.mubr.f32.mxu0 0.0
  %231 = vmatmul.mubr.f32.gmra.mxu0 %v95
  %v232 = vpop.f32.mrf.mxu0
  %v233 = vadd.f32 %v56, %v232
  %v234 = vpop.f32.mrf.mxu0
  %235 = vmatprep.mubr.f32.mxu0 0.0
  %236 = vmatmul.mubr.f32.gmra.mxu0 %v98
  %v237 = vpop.f32.mrf.mxu0
  %v238 = vadd.f32 %v61, %v237
  %v239 = vpop.f32.mrf.mxu0
  %240 = vmatprep.mubr.f32.mxu0 0.0
  %241 = vmatmul.mubr.f32.gmra.mxu0 %v101
  %v242 = vpop.f32.mrf.mxu0
  %v243 = vadd.f32 %v66, %v242
  %v244 = vpop.f32.mrf.mxu0
  %245 = vmatprep.mubr.f32.mxu0 0.0
  %246 = vmatmul.mubr.f32.gmra.mxu0 %v104
  %v247 = vpop.f32.mrf.mxu0
  %v248 = vadd.f32 %v71, %v247
  %v249 = vpop.f32.mrf.mxu0
  %250 = vmatprep.mubr.f32.mxu0 0.0
  %251 = vmatmul.mubr.f32.gmra.mxu0 %v107
  %v252 = vpop.f32.mrf.mxu0
  %v253 = vadd.f32 %v76, %v252
  %v254 = vpop.f32.mrf.mxu0
  %255 = vmatprep.mubr.f32.mxu0 0.0
  %256 = vmatmul.mubr.f32.gmra.mxu0 %v110
  %v257 = vpop.f32.mrf.mxu0
  %v258 = vadd.f32 %v81, %v257
  %v259 = vpop.f32.mrf.mxu0
  %260 = vmatprep.mubr.f32.mxu0 0.0
  %261 = vmatmul.mubr.f32.gmra.mxu0 %v113
  %v262 = vpop.f32.mrf.mxu0
  %v263 = vadd.f32 %v86, %v262
  %v264 = vpop.f32.mrf.mxu0
  %265 = vmatprep.mubr.f32.mxu0 0.0
  %266 = vmatmul.mubr.f32.gmra.mxu0 %v116
  %v267 = vpop.f32.mrf.mxu0
  %v268 = vadd.f32 %v91, %v267
  %v269 = vpop.f32.mrf.mxu0
  %270 = vdwg.mxu0
  %v271 = vmax.f32 %v233, 0.0
  %v272 = vmax.f32 %v238, 0.0
  %v273 = vmax.f32 %v243, 0.0
  %v274 = vmax.f32 %v248, 0.0
  %v275 = vmax.f32 %v253, 0.0
  %v276 = vmax.f32 %v258, 0.0
  %v277 = vmax.f32 %v263, 0.0
  %v278 = vmax.f32 %v268, 0.0
  %v279 = vld [vmem:[%s3] sm:$0xff]
  %v280 = vld [vmem:[%s3 + $0x8] sm:$0xff]
  %v281 = vld [vmem:[%s3 + $0x10] sm:$0xff]
  %v282 = vld [vmem:[%s3 + $0x18] sm:$0xff]
  %v283 = vld [vmem:[%s3 + $0x20] sm:$0xff]
  %v284 = vld [vmem:[%s3 + $0x28] sm:$0xff]
  %v285 = vld [vmem:[%s3 + $0x30] sm:$0xff]
  %v286 = vld [vmem:[%s3 + $0x38] sm:$0xff]
  %288 = vset.pattern.permute.xlu0 0
  %289 = vperm.xlu0 %288, %v279
  %v290 = vpop.permute.xlu0 %289
  %293 = vset.pattern.permute.xlu0 0
  %294 = vperm.xlu0 %293, %v280
  %v295 = vpop.permute.xlu0 %294
  %298 = vset.pattern.permute.xlu0 0
  %299 = vperm.xlu0 %298, %v281
  %v300 = vpop.permute.xlu0 %299
  %303 = vset.pattern.permute.xlu0 0
  %304 = vperm.xlu0 %303, %v282
  %v305 = vpop.permute.xlu0 %304
  %308 = vset.pattern.permute.xlu0 0
  %309 = vperm.xlu0 %308, %v283
  %v310 = vpop.permute.xlu0 %309
  %313 = vset.pattern.permute.xlu0 0
  %314 = vperm.xlu0 %313, %v284
  %v315 = vpop.permute.xlu0 %314
  %318 = vset.pattern.permute.xlu0 0
  %319 = vperm.xlu0 %318, %v285
  %v320 = vpop.permute.xlu0 %319
  %323 = vset.pattern.permute.xlu0 0
  %324 = vperm.xlu0 %323, %v286
  %v325 = vpop.permute.xlu0 %324
  %v327 = vmul.f32 %v271, %v290
  %v328 = vmul.f32 %v272, %v295
  %v329 = vmul.f32 %v273, %v300
  %v330 = vmul.f32 %v274, %v305
  %v331 = vmul.f32 %v275, %v310
  %v332 = vmul.f32 %v276, %v315
  %v333 = vmul.f32 %v277, %v320
  %v334 = vmul.f32 %v278, %v325
  %v335 = vadd.f32 %v327, %v328
  %v336 = vadd.f32 %v335, %v329
  %v337 = vadd.f32 %v336, %v330
  %v338 = vadd.f32 %v337, %v331
  %v339 = vadd.f32 %v338, %v332
  %v340 = vadd.f32 %v339, %v333
  %v341 = vadd.f32 %v340, %v334
  %v342 = vrot.slane %v341, 4
  %v343 = vadd.f32 %v341, %v342
  %v344 = vrot.slane %v343, 2
  %v345 = vadd.f32 %v343, %v344
  %v346 = vrot.slane %v345, 1
  %v347 = vadd.f32 %v345, %v346
  %s348 = sld [smem:[#allocation2]]
  %v349 = vstv %s348
  %v350 = vadd.f32 %v347, %v349
  %351 = vst [vmem:[%s5] sm:$0x1] %v350
  // Predicated region
  $region22: #{value_net_forward.1} parent=0 // pred_check
    _
  $region23: #{value_net_forward.1} parent=0 // pred_check_branch
    %353 = sbr.rel (0) target = $region25
  $region24: #{value_net_forward.1} parent=0 // pred_region
    _
  $region25: #{value_net_forward.1} parent=0 // pred_fallthru
    _
  // Predicated region
  $region26: #{value_net_forward.1} parent=0 // pred_check
    _
  $region27: #{value_net_forward.1} parent=0 // pred_check_branch
    %355 = sbr.rel (0) target = $region29
  $region28: #{value_net_forward.1} parent=0 // pred_region
    _
  $region29: #{value_net_forward.1} parent=0 // pred_fallthru
    _

</llo_original>
